<compile_context>
chip_gen: v7x
topology: tpu7x:2x2x1
jax: 0.10.0
libtpu: 0.0.40
codegen_flags: <defaults>
</compile_context>

<pallas_src>
import functools

import jax
import jax.numpy as jnp
from jax.experimental import pallas as pl
from jax.experimental.pallas import tpu as pltpu

_MiB = 1024 * 1024


# ---------------------------------------------------------------------------
# Kernels
# ---------------------------------------------------------------------------

def _se_kernel_3d(x_ref, w1_ref, b1_ref, w2_ref, b2_ref, o_ref):
    """Blocks: x/o (bt, C, L); w1 (C, H); b1 (1, H); w2 (H, C); b2 (1, C)."""
    x = x_ref[...]                                                  # (bt, C, L)

    # Squeeze: mean over L, f32 accumulation without an f32 block copy.
    y = jnp.mean(x, axis=2, dtype=jnp.float32)                      # (bt, C)

    # Excite: Linear -> SiLU -> Linear -> Sigmoid (tiny; MXU/EUP filler).
    h = jnp.dot(y, w1_ref[...], preferred_element_type=jnp.float32) + b1_ref[...]
    h = h * jax.nn.sigmoid(h)                                       # SiLU
    s = jnp.dot(h, w2_ref[...], preferred_element_type=jnp.float32) + b2_ref[...]
    s = jax.nn.sigmoid(s)                                           # (bt, C) gate

    # Scale in x's native dtype (no f32 copy of the block).
    o_ref[...] = x * s.astype(x.dtype)[:, :, None]


def _se_kernel_flat(x_ref, pool_ref, w1_ref, b1_ref, w2_ref, b2_ref, exp_ref,
                    o_ref, *, inv_l):
    """Lane-dense path.  Blocks: x/o (bt, C*L); pool (C*L, C); exp (C, C*L)."""
    x = x_ref[...]                                                  # (bt, C*L)

    # Squeeze as a matmul against the 0/1 channel-pooling matrix (exact 1.0
    # entries), scaled by 1/L in f32.  ~C MACs/element on the otherwise idle
    # MXU; no f32 copy of the block is materialised.
    y = jnp.dot(x, pool_ref[...], preferred_element_type=jnp.float32) * inv_l

    h = jnp.dot(y, w1_ref[...], preferred_element_type=jnp.float32) + b1_ref[...]
    h = h * jax.nn.sigmoid(h)                                       # SiLU
    s = jnp.dot(h, w2_ref[...], preferred_element_type=jnp.float32) + b2_ref[...]
    s = jax.nn.sigmoid(s)                                           # (bt, C)

    # Gate broadcast (bt, C) -> (bt, C*L) as a matmul against the 0/1
    # expansion matrix.  Split s into bf16 hi/lo parts so the broadcast stays
    # accurate even if the f32 matmul runs as single bf16 MXU passes.
    s_hi = s.astype(jnp.bfloat16).astype(jnp.float32)
    s_lo = s - s_hi
    e = exp_ref[...]
    gate = (jnp.dot(s_hi, e, preferred_element_type=jnp.float32)
            + jnp.dot(s_lo, e, preferred_element_type=jnp.float32))

    o_ref[...] = x * gate.astype(x.dtype)


# ---------------------------------------------------------------------------
# Tiling helpers
# ---------------------------------------------------------------------------

def _vmem_budget_and_limit():
    """Generation-aware (budget_for_block_buffers, vmem_limit_bytes)."""
    cap = 64 * _MiB                       # conservative default (v7x per-core VMEM)
    try:
        cap = int(pltpu.get_tpu_info().vmem_capacity_bytes)
    except Exception:
        pass
    # Leave >=16 MiB of headroom for compiler scratch / resident weights.
    limit = max(32 * _MiB, min(cap - 16 * _MiB, 100 * _MiB))
    budget = limit // 2                   # share reserved for the x/out block buffers
    return budget, limit


def _pick_block_b(B, C, L, itemsize, budget, limit, *, sublane_align=1,
                  target_steps=8):
    """Batch tile: fits the VMEM budget AND keeps >= target_steps grid steps."""
    row_bytes = C * L * itemsize
    # Double-buffered input + output blocks, plus ~one f32 row of temporaries
    # (gate / accumulation) per sample in the tile.
    per_row = 4 * row_bytes + 2 * C * L * 4
    bt = min(B, max(1, pl.cdiv(B, target_steps)), max(1, budget // per_row))
    if sublane_align > 1:
        # Flat (2-D) blocks: keep the second-minor dim 8/16/32-aligned unless
        # it spans the full (unpadded) batch.
        bt = B if B <= sublane_align else max(sublane_align,
                                              (bt // sublane_align) * sublane_align)
    if per_row * bt > limit:
        # TODO(synk): add an L-split two-pass fallback (f32 accumulator scratch
        # + pl.when init/finalize) for samples whose C*L alone overflows VMEM.
        raise ValueError(
            f"SELayer Pallas kernel: one batch tile ({bt}x{C}x{L}, "
            f"{per_row * bt} bytes double-buffered) exceeds the VMEM limit "
            f"({limit} bytes).")
    return int(bt)


# ---------------------------------------------------------------------------
# Wrapper
# ---------------------------------------------------------------------------

def se_layer(x, w1, b1, w2, b2, *, block_b=None, target_steps=8):
    """x: (B, C, L); w1: (C, H); b1: (H,); w2: (H, C); b2: (C,).

    Weight matrices are pre-transposed relative to torch.nn.Linear.weight.
    """
    B, C, L = x.shape
    H = w1.shape[1]
    itemsize = x.dtype.itemsize
    budget, vmem_limit = _vmem_budget_and_limit()

    b1_2d = b1.reshape(1, H).astype(jnp.float32)
    b2_2d = b2.reshape(1, C).astype(jnp.float32)

    compiler_params = pltpu.CompilerParams(
        dimension_semantics=("parallel",),       # megacore sharding of the B grid
        vmem_limit_bytes=int(vmem_limit),
    )

    # Lane-dense flat path only when L is not already a multiple of 128 and the
    # constant pool/expand matrices stay small; otherwise the plain 3-D path.
    const_bytes = C * L * C * (itemsize + 4)
    use_flat = (L % 128 != 0) and (const_bytes <= 4 * _MiB)

    if not use_flat:
        bt = (_pick_block_b(B, C, L, itemsize, budget, vmem_limit,
                            target_steps=target_steps)
              if block_b is None else int(block_b))
        steps = int(pl.cdiv(B, bt))
        Bp = steps * bt
        xp = jnp.pad(x, ((0, Bp - B), (0, 0), (0, 0))) if Bp != B else x

        out = pl.pallas_call(
            _se_kernel_3d,
            out_shape=jax.ShapeDtypeStruct((Bp, C, L), x.dtype),
            grid=(steps,),
            in_specs=[
                pl.BlockSpec((bt, C, L), lambda i: (i, 0, 0)),   # x: tiled over B
                pl.BlockSpec((C, H), lambda i: (0, 0)),          # w1 (resident)
                pl.BlockSpec((1, H), lambda i: (0, 0)),          # b1
                pl.BlockSpec((H, C), lambda i: (0, 0)),          # w2
                pl.BlockSpec((1, C), lambda i: (0, 0)),          # b2
            ],
            out_specs=pl.BlockSpec((bt, C, L), lambda i: (i, 0, 0)),
            compiler_params=compiler_params,
            cost_estimate=pl.CostEstimate(
                flops=4 * Bp * C * H,
                transcendentals=Bp * (H + C),
                bytes_accessed=2 * Bp * C * L * itemsize,
            ),
        )(xp, w1, b1_2d, w2, b2_2d)
        return out[:B] if Bp != B else out

    # ---------------- lane-dense flat path (L % 128 != 0) ----------------
    CL = C * L
    sub = max(1, 32 // itemsize)                  # 8 f32 / 16 bf16 / 32 int8 sublanes
    bt = (_pick_block_b(B, C, L, itemsize, budget, vmem_limit,
                        sublane_align=sub, target_steps=target_steps)
          if block_b is None else int(block_b))
    steps = int(pl.cdiv(B, bt))
    Bp = steps * bt

    x2 = x.reshape(B, CL)
    if Bp != B:
        x2 = jnp.pad(x2, ((0, Bp - B), (0, 0)))

    ch = jnp.arange(CL, dtype=jnp.int32) // L                      # channel per position
    onehot = ch[:, None] == jnp.arange(C, dtype=jnp.int32)[None, :]
    pool = onehot.astype(x.dtype)                                  # (C*L, C), exact 1.0s
    expand = onehot.T.astype(jnp.float32)                          # (C, C*L)

    out2 = pl.pallas_call(
        functools.partial(_se_kernel_flat, inv_l=1.0 / L),
        out_shape=jax.ShapeDtypeStruct((Bp, CL), x.dtype),
        grid=(steps,),
        in_specs=[
            pl.BlockSpec((bt, CL), lambda i: (i, 0)),    # x slab: tiled over B
            pl.BlockSpec((CL, C), lambda i: (0, 0)),     # pooling matrix (resident)
            pl.BlockSpec((C, H), lambda i: (0, 0)),      # w1
            pl.BlockSpec((1, H), lambda i: (0, 0)),      # b1
            pl.BlockSpec((H, C), lambda i: (0, 0)),      # w2
            pl.BlockSpec((1, C), lambda i: (0, 0)),      # b2
            pl.BlockSpec((C, CL), lambda i: (0, 0)),     # expansion matrix
        ],
        out_specs=pl.BlockSpec((bt, CL), lambda i: (i, 0)),
        compiler_params=compiler_params,
        cost_estimate=pl.CostEstimate(
            flops=6 * Bp * C * CL + 4 * Bp * C * H,
            transcendentals=Bp * (H + C),
            bytes_accessed=2 * Bp * CL * itemsize,
        ),
    )(x2, pool, w1, b1_2d, w2, b2_2d, expand)

    out2 = out2[:B] if Bp != B else out2
    return out2.reshape(B, C, L)


def se_layer_ref(x, w1, b1, w2, b2):
    """Pure-JAX reference mirroring the PyTorch forward."""
    y = jnp.mean(x, axis=2)
    h = y @ w1 + b1
    h = h * jax.nn.sigmoid(h)
    s = jax.nn.sigmoid(h @ w2 + b2)
    return x * s[:, :, None]


if __name__ == "__main__":
    # Module hyperparameters: SELayer(inp=32, oup=8, reduction=4)
    #   fc = Linear(8 -> 8), SiLU, Linear(8 -> 8), Sigmoid; channels C = oup = 8.
    inp, oup, reduction = 32, 8, 4
    hidden = inp // reduction
    C = oup

    key = jax.random.PRNGKey(0)
    kx1, kx2, kw1, kb1, kw2, kb2 = jax.random.split(key, 6)

    # PyTorch Linear(oup, hidden).weight is (hidden, oup); we store the transpose.
    w1 = jax.random.normal(kw1, (oup, hidden), dtype=jnp.float32) * 0.1
    b1 = jax.random.normal(kb1, (hidden,), dtype=jnp.float32) * 0.1
    w2 = jax.random.normal(kw2, (hidden, oup), dtype=jnp.float32) * 0.1
    b2 = jax.random.normal(kb2, (oup,), dtype=jnp.float32) * 0.1

    # Case 1: lane-dense L (multiple of 128) -> 3-D blocked path, 8-step grid.
    B1, L1 = 32, 128
    x1 = jax.random.normal(kx1, (B1, C, L1), dtype=jnp.float32)
    out1 = jax.block_until_ready(se_layer(x1, w1, b1, w2, b2))
    ref1 = se_layer_ref(x1, w1, b1, w2, b2)
    assert out1.shape == x1.shape
    assert jnp.allclose(out1, ref1, atol=1e-5, rtol=1e-5), "3-D path mismatch"

    # Case 2: odd L (not a multiple of 128) and a B that does not divide the
    # tile -> lane-dense flat path with matmul pool/expand and a padded edge.
    # Slightly looser tolerance: the pooling matmul may run as bf16 MXU passes.
    B2, L2 = 22, 96
    x2 = jax.random.normal(kx2, (B2, C, L2), dtype=jnp.float32)
    out2 = jax.block_until_ready(se_layer(x2, w1, b1, w2, b2))
    ref2 = se_layer_ref(x2, w1, b1, w2, b2)
    assert out2.shape == x2.shape
    assert jnp.allclose(out2, ref2, atol=1e-4, rtol=1e-4), "flat path mismatch"

    print("KERNEL_OK")
</pallas_src>

<mosaic_0001>
module attributes {stable_mosaic.version = 11 : i64} {
  func.func @_se_kernel_3d(%arg0: i32, %arg1: memref<4x8x128xf32, #tpu.memory_space<vmem>>, %arg2: memref<8x8xf32, #tpu.memory_space<vmem>>, %arg3: memref<1x8xf32, #tpu.memory_space<vmem>>, %arg4: memref<8x8xf32, #tpu.memory_space<vmem>>, %arg5: memref<1x8xf32, #tpu.memory_space<vmem>>, %arg6: memref<4x8x128xf32, #tpu.memory_space<vmem>>) attributes {dimension_semantics = [#tpu.dimension_semantics<parallel>], iteration_bounds = array<i64: 8>, scalar_prefetch = 0 : i64, scratch_operands = 0 : i64, tpu.core_type = #tpu.core_type<tc>, window_params = [{transform_indices = @transform_0, window_bounds = array<i64: 4, 8, 128>}, {pipeline_mode = #tpu.pipeline_mode<synchronous>, transform_indices = @transform_1, window_bounds = array<i64: 8, 8>}, {pipeline_mode = #tpu.pipeline_mode<synchronous>, transform_indices = @transform_2, window_bounds = array<i64: 1, 8>}, {pipeline_mode = #tpu.pipeline_mode<synchronous>, transform_indices = @transform_3, window_bounds = array<i64: 8, 8>}, {pipeline_mode = #tpu.pipeline_mode<synchronous>, transform_indices = @transform_4, window_bounds = array<i64: 1, 8>}, {transform_indices = @transform_5, window_bounds = array<i64: 4, 8, 128>}]} {
    %c0 = arith.constant 0 : index
    %c0_0 = arith.constant 0 : index
    %c0_1 = arith.constant 0 : index
    %0 = vector.load %arg1[%c0, %c0_0, %c0_1] : memref<4x8x128xf32, #tpu.memory_space<vmem>>, vector<4x8x128xf32>
    %cst = arith.constant dense<0.000000e+00> : vector<4x8xf32>
    %1 = vector.multi_reduction <add>, %0, %cst [2] : vector<4x8x128xf32> to vector<4x8xf32>
    %cst_2 = arith.constant 1.280000e+02 : f32
    %2 = vector.broadcast %cst_2 : f32 to vector<4x8xf32>
    %3 = arith.divf %1, %2 : vector<4x8xf32>
    %c0_3 = arith.constant 0 : index
    %c0_4 = arith.constant 0 : index
    %4 = vector.load %arg2[%c0_3, %c0_4] : memref<8x8xf32, #tpu.memory_space<vmem>>, vector<8x8xf32>
    %cst_5 = arith.constant dense<0.000000e+00> : vector<4x8xf32>
    %5 = tpu.matmul %3, %4, %cst_5 {dimension_numbers = #tpu.dot_dimension_numbers<[1], [0], [0], [1], [0, 0, 1, 1], [], []>} : vector<4x8xf32>, vector<8x8xf32>, vector<4x8xf32> -> vector<4x8xf32>
    %c0_6 = arith.constant 0 : index
    %c0_7 = arith.constant 0 : index
    %6 = vector.load %arg3[%c0_6, %c0_7] : memref<1x8xf32, #tpu.memory_space<vmem>>, vector<1x8xf32>
    %7 = vector.broadcast %6 : vector<1x8xf32> to vector<4x8xf32>
    %8 = arith.addf %5, %7 : vector<4x8xf32>
    %9 = arith.negf %8 : vector<4x8xf32>
    %10 = math.exp %9 : vector<4x8xf32>
    %cst_8 = arith.constant 1.000000e+00 : f32
    %11 = vector.broadcast %cst_8 : f32 to vector<4x8xf32>
    %12 = arith.addf %11, %10 : vector<4x8xf32>
    %13 = arith.divf %11, %12 : vector<4x8xf32>
    %14 = arith.mulf %8, %13 : vector<4x8xf32>
    %c0_9 = arith.constant 0 : index
    %c0_10 = arith.constant 0 : index
    %15 = vector.load %arg4[%c0_9, %c0_10] : memref<8x8xf32, #tpu.memory_space<vmem>>, vector<8x8xf32>
    %cst_11 = arith.constant dense<0.000000e+00> : vector<4x8xf32>
    %16 = tpu.matmul %14, %15, %cst_11 {dimension_numbers = #tpu.dot_dimension_numbers<[1], [0], [0], [1], [0, 0, 1, 1], [], []>} : vector<4x8xf32>, vector<8x8xf32>, vector<4x8xf32> -> vector<4x8xf32>
    %c0_12 = arith.constant 0 : index
    %c0_13 = arith.constant 0 : index
    %17 = vector.load %arg5[%c0_12, %c0_13] : memref<1x8xf32, #tpu.memory_space<vmem>>, vector<1x8xf32>
    %18 = vector.broadcast %17 : vector<1x8xf32> to vector<4x8xf32>
    %19 = arith.addf %16, %18 : vector<4x8xf32>
    %20 = arith.negf %19 : vector<4x8xf32>
    %21 = math.exp %20 : vector<4x8xf32>
    %cst_14 = arith.constant 1.000000e+00 : f32
    %22 = vector.broadcast %cst_14 : f32 to vector<4x8xf32>
    %23 = arith.addf %22, %21 : vector<4x8xf32>
    %24 = arith.divf %22, %23 : vector<4x8xf32>
    %25 = vector.shape_cast %24 : vector<4x8xf32> to vector<4x8x1xf32>
    %26 = vector.broadcast %25 : vector<4x8x1xf32> to vector<4x8x128xf32>
    %27 = arith.mulf %0, %26 : vector<4x8x128xf32>
    %c0_15 = arith.constant 0 : index
    %c0_16 = arith.constant 0 : index
    %c0_17 = arith.constant 0 : index
    %28 = vector.load %arg6[%c0_15, %c0_16, %c0_17] : memref<4x8x128xf32, #tpu.memory_space<vmem>>, vector<4x8x128xf32>
    tpu.vector_store %arg6[%c0_15, %c0_16, %c0_17], %27 {strides = array<i32>} : memref<4x8x128xf32, #tpu.memory_space<vmem>>, vector<4x8x128xf32>,
    return
  }
  func.func @transform_0(%arg0: i32) -> (i32, i32, i32) {
    %c0_i32 = arith.constant 0 : i32
    %c0_i32_0 = arith.constant 0 : i32
    %c0_i32_1 = arith.constant 0 : i32
    return %arg0, %c0_i32, %c0_i32_0 : i32, i32, i32
  }
  func.func @transform_1(%arg0: i32) -> (i32, i32) {
    %c0_i32 = arith.constant 0 : i32
    %c0_i32_0 = arith.constant 0 : i32
    %c0_i32_1 = arith.constant 0 : i32
    return %c0_i32, %c0_i32_0 : i32, i32
  }
  func.func @transform_2(%arg0: i32) -> (i32, i32) {
    %c0_i32 = arith.constant 0 : i32
    %c0_i32_0 = arith.constant 0 : i32
    %c0_i32_1 = arith.constant 0 : i32
    return %c0_i32, %c0_i32_0 : i32, i32
  }
  func.func @transform_3(%arg0: i32) -> (i32, i32) {
    %c0_i32 = arith.constant 0 : i32
    %c0_i32_0 = arith.constant 0 : i32
    %c0_i32_1 = arith.constant 0 : i32
    return %c0_i32, %c0_i32_0 : i32, i32
  }
  func.func @transform_4(%arg0: i32) -> (i32, i32) {
    %c0_i32 = arith.constant 0 : i32
    %c0_i32_0 = arith.constant 0 : i32
    %c0_i32_1 = arith.constant 0 : i32
    return %c0_i32, %c0_i32_0 : i32, i32
  }
  func.func @transform_5(%arg0: i32) -> (i32, i32, i32) {
    %c0_i32 = arith.constant 0 : i32
    %c0_i32_0 = arith.constant 0 : i32
    %c0_i32_1 = arith.constant 0 : i32
    return %arg0, %c0_i32, %c0_i32_0 : i32, i32, i32
  }
}

</mosaic_0001>

<llo_original>
// kernel: tpu_custom_call.1
$region0: #{tpu_custom_call.1}
  #allocation0 [shape = 'u32[]', space=smem, size = 0x4, offset = 0x4, fixed_abs, tag = 'smem constant byte address 0x4 - core index']
  #allocation1 [shape = 'u32[144,128]{1,0:T(1,128)}', space=vmem, size = 0x12000, scoped, tag = 'internal scratch']
  %s0 = inlined_call_operand.hbm [shape: f32[32,8,128], index: 0, kind: input, shape index: {}]
  %s1 = inlined_call_operand.hbm [shape: f32[8,8], index: 1, kind: input, shape index: {}]
  %s2 = inlined_call_operand.vmem [shape: f32[1,8], index: 2, kind: input, shape index: {}]
  %s3 = inlined_call_operand.vmem [shape: f32[8,8], index: 3, kind: input, shape index: {}]
  %s4 = inlined_call_operand.vmem [shape: f32[1,8], index: 4, kind: input, shape index: {}]
  %s5 = inlined_call_operand.hbm [shape: f32[32,8,128], index: 5, kind: output, shape index: {}]
  %s6 = sld [smem:[#allocation0]]
  $region61: #{tpu_custom_call.1} parent=0
    _
  %s8 = ssub.s32 1, %s6
  %s9 = scalar_select 0, %s8, %s6
  $region1: #{tpu_custom_call.1} parent=0
    #allocation2 [shape = 'u8[32768]{0}', space=vmem, size = 0x8000, scoped, tag = 'input window, operand 0']
    #allocation3 [shape = 's32[2]{0}', space=sflag, size = 0x8, scoped, tag = 'scoped memory for tpu_custom_call.1']
    #allocation4 [shape = 's32[2]{0}', space=sflag, size = 0x8, scoped, tag = 'scoped memory for tpu_custom_call.1']
    #allocation5 [shape = 'u8[4096]{0}', space=vmem, size = 0x1000, scoped, tag = 'input window, operand 1, single buffered']
    #allocation6 [shape = 's32[1]{0}', space=sflag, size = 0x4, scoped, tag = 'scoped memory for tpu_custom_call.1']
    #allocation7 [shape = 'u8[32768]{0}', space=vmem, size = 0x8000, scoped, tag = 'output window, operand 0']
    %10 = vsyncpa [#allocation3], 0
    %s11 = scalar_lea.sflag [#allocation3], 1
    %12 = vsyncpa %s11, 0
    %13 = vsyncpa [#allocation6], 0
    %14 = vsyncpa [#allocation4], 0
    %s15 = scalar_lea.sflag [#allocation4], 1
    %16 = vsyncpa %s15, 0
    loop: start=0, step=1, limit=10
    $region2: #{tpu_custom_call.1} parent=1 // loop_pre_header
      _
    $region3: #{tpu_custom_call.1} parent=1 // loop_header
      %s18 = sphi 0, %s22
      %p19 = scmp.ge.s32.totalorder %s18, 10
      %s28 = sphi 0, %s30
      %s31 = sphi 0, %s28
      %s32 = sphi 0, %s31
      %s48 = sphi 0, %s32
      %s52 = sphi 0, %s52
      %s54 = sphi 0, %s52
      %s55 = sphi 0, %s54
      %s69 = sphi 0, %s55
      %s73 = sphi 0, %s73
      %s75 = sphi 0, %s73
      %s76 = sphi 0, %s75
      %s90 = sphi 0, %s76
      %s94 = sphi 0, %s94
      %s96 = sphi 0, %s94
      %s97 = sphi 0, %s96
      %s111 = sphi 0, %s97
      %s115 = sphi 0, %s115
      %s117 = sphi 0, %s115
      %s118 = sphi 0, %s117
      %s132 = sphi 0, %s118
      %s138 = sphi 0, %s140
      %s141 = sphi 0, %s138
      %s142 = sphi 0, %s141
      %s158 = sphi 0, %s142
    $region4: #{tpu_custom_call.1} parent=1 // loop_header_branch
      %21 = sbr.rel (%p19) target = $region8
    $region5: #{tpu_custom_call.1} parent=1 // loop_body
      %s23 = ssub.s32 %s18, 1
      %s24 = ssub.s32 %s18, 2
      %s25 = sadd.s32 %s18, 1
      %s26 = ssub.s32 %s18, %s25
      %p27 = scmp.eq.s32.totalorder %s26, 0
      %s29 = sadd.s32 %s28, 1
      %s30 = scalar_select %p27, %s28, %s29
      %p33 = pneg %p27
      %p34 = scmp.eq.s32.totalorder %s18, 7
      %p35 = por %p33, %p34
      %p36 = scmp.ne.s32.totalorder %s28, %s31
      %p37 = scmp.eq.s32.totalorder %s18, 0
      %p38 = por %p36, %p37
      %p39 = scmp.ne.s32.totalorder %s28, %s31
      %p40 = scmp.eq.s32.totalorder %s23, 7
      %p41 = por %p39, %p40
      %p42 = scmp.ne.s32.totalorder %s31, %s32
      %p43 = scmp.eq.s32.totalorder %s23, 0
      %p44 = por %p42, %p43
      %p45 = scmp.ne.s32.totalorder %s31, %s32
      %p46 = scmp.eq.s32.totalorder %s24, 7
      %p47 = por %p45, %p46
      %p49 = scmp.ne.s32.totalorder %s32, %s48
      %p50 = scmp.eq.s32.totalorder %s24, 0
      %p51 = por %p49, %p50
      %s53 = sadd.s32 %s52, 1
      %p56 = scmp.eq.s32.totalorder %s18, 7
      %p57 = scmp.ne.s32.totalorder %s52, %s54
      %p58 = scmp.eq.s32.totalorder %s18, 0
      %p59 = por %p57, %p58
      %p60 = scmp.ne.s32.totalorder %s52, %s54
      %p61 = scmp.eq.s32.totalorder %s23, 7
      %p62 = por %p60, %p61
      %p63 = scmp.ne.s32.totalorder %s54, %s55
      %p64 = scmp.eq.s32.totalorder %s23, 0
      %p65 = por %p63, %p64
      %p66 = scmp.ne.s32.totalorder %s54, %s55
      %p67 = scmp.eq.s32.totalorder %s24, 7
      %p68 = por %p66, %p67
      %p70 = scmp.ne.s32.totalorder %s55, %s69
      %p71 = scmp.eq.s32.totalorder %s24, 0
      %p72 = por %p70, %p71
      %s74 = sadd.s32 %s73, 1
      %p77 = scmp.eq.s32.totalorder %s18, 7
      %p78 = scmp.ne.s32.totalorder %s73, %s75
      %p79 = scmp.eq.s32.totalorder %s18, 0
      %p80 = por %p78, %p79
      %p81 = scmp.ne.s32.totalorder %s73, %s75
      %p82 = scmp.eq.s32.totalorder %s23, 7
      %p83 = por %p81, %p82
      %p84 = scmp.ne.s32.totalorder %s75, %s76
      %p85 = scmp.eq.s32.totalorder %s23, 0
      %p86 = por %p84, %p85
      %p87 = scmp.ne.s32.totalorder %s75, %s76
      %p88 = scmp.eq.s32.totalorder %s24, 7
      %p89 = por %p87, %p88
      %p91 = scmp.ne.s32.totalorder %s76, %s90
      %p92 = scmp.eq.s32.totalorder %s24, 0
      %p93 = por %p91, %p92
      %s95 = sadd.s32 %s94, 1
      %p98 = scmp.eq.s32.totalorder %s18, 7
      %p99 = scmp.ne.s32.totalorder %s94, %s96
      %p100 = scmp.eq.s32.totalorder %s18, 0
      %p101 = por %p99, %p100
      %p102 = scmp.ne.s32.totalorder %s94, %s96
      %p103 = scmp.eq.s32.totalorder %s23, 7
      %p104 = por %p102, %p103
      %p105 = scmp.ne.s32.totalorder %s96, %s97
      %p106 = scmp.eq.s32.totalorder %s23, 0
      %p107 = por %p105, %p106
      %p108 = scmp.ne.s32.totalorder %s96, %s97
      %p109 = scmp.eq.s32.totalorder %s24, 7
      %p110 = por %p108, %p109
      %p112 = scmp.ne.s32.totalorder %s97, %s111
      %p113 = scmp.eq.s32.totalorder %s24, 0
      %p114 = por %p112, %p113
      %s116 = sadd.s32 %s115, 1
      %p119 = scmp.eq.s32.totalorder %s18, 7
      %p120 = scmp.ne.s32.totalorder %s115, %s117
      %p121 = scmp.eq.s32.totalorder %s18, 0
      %p122 = por %p120, %p121
      %p123 = scmp.ne.s32.totalorder %s115, %s117
      %p124 = scmp.eq.s32.totalorder %s23, 7
      %p125 = por %p123, %p124
      %p126 = scmp.ne.s32.totalorder %s117, %s118
      %p127 = scmp.eq.s32.totalorder %s23, 0
      %p128 = por %p126, %p127
      %p129 = scmp.ne.s32.totalorder %s117, %s118
      %p130 = scmp.eq.s32.totalorder %s24, 7
      %p131 = por %p129, %p130
      %p133 = scmp.ne.s32.totalorder %s118, %s132
      %p134 = scmp.eq.s32.totalorder %s24, 0
      %p135 = por %p133, %p134
      %s136 = ssub.s32 %s18, %s25
      %p137 = scmp.eq.s32.totalorder %s136, 0
      %s139 = sadd.s32 %s138, 1
      %s140 = scalar_select %p137, %s138, %s139
      %p143 = pneg %p137
      %p144 = scmp.eq.s32.totalorder %s18, 7
      %p145 = por %p143, %p144
      %p146 = scmp.ne.s32.totalorder %s138, %s141
      %p147 = scmp.eq.s32.totalorder %s18, 0
      %p148 = por %p146, %p147
      %p149 = scmp.ne.s32.totalorder %s138, %s141
      %p150 = scmp.eq.s32.totalorder %s23, 7
      %p151 = por %p149, %p150
      %p152 = scmp.ne.s32.totalorder %s141, %s142
      %p153 = scmp.eq.s32.totalorder %s23, 0
      %p154 = por %p152, %p153
      %p155 = scmp.ne.s32.totalorder %s141, %s142
      %p156 = scmp.eq.s32.totalorder %s24, 7
      %p157 = por %p155, %p156
      %p159 = scmp.ne.s32.totalorder %s142, %s158
      %p160 = scmp.eq.s32.totalorder %s24, 0
      %p161 = por %p159, %p160
      %p162 = scmp.le.s32.totalorder 1, %s18
      %p163 = scmp.lt.s32.totalorder %s18, 9
      %p164 = pnand %p162, %p163
      %p165 = pneg %p164
      // Predicated region
      $region9: #{tpu_custom_call.1} parent=5 // pred_check
        _
      $region10: #{tpu_custom_call.1} parent=5 // pred_check_branch
        %167 = sbr.rel (%p164) target = $region12
      $region11: #{tpu_custom_call.1} parent=5 // pred_region
        %s168 = ssub.s32 %s18, 1
        // Predicated region
        $region13: #{tpu_custom_call.1} parent=11 // pred_check
          %p169 = pneg %p65
        $region14: #{tpu_custom_call.1} parent=11 // pred_check_branch
          %171 = sbr.rel (%p169) target = $region16
        $region15: #{tpu_custom_call.1} parent=11 // pred_region
          %s173 = ssub.s32 128, 128
          %174 = vsyncadd [#allocation6], %s173
          %s176 = sshll.u32 [#allocation5], 4
          %s177 = int_to_ptr.vmem [resolvable:$true] %s176
          %179 = dma.hbm_to_vmem [thread:$0]  %s1, 128, %s177, [#allocation6]
        $region16: #{tpu_custom_call.1} parent=11 // pred_fallthru
          _
        // Predicated region
        $region17: #{tpu_custom_call.1} parent=11 // pred_check
          %p180 = pneg %p86
        $region18: #{tpu_custom_call.1} parent=11 // pred_check_branch
          %182 = sbr.rel (%p180) target = $region20
        $region19: #{tpu_custom_call.1} parent=11 // pred_region
          _
        $region20: #{tpu_custom_call.1} parent=11 // pred_fallthru
          _
        // Predicated region
        $region21: #{tpu_custom_call.1} parent=11 // pred_check
          %p183 = pneg %p107
        $region22: #{tpu_custom_call.1} parent=11 // pred_check_branch
          %185 = sbr.rel (%p183) target = $region24
        $region23: #{tpu_custom_call.1} parent=11 // pred_region
          _
        $region24: #{tpu_custom_call.1} parent=11 // pred_fallthru
          _
        // Predicated region
        $region25: #{tpu_custom_call.1} parent=11 // pred_check
          %p186 = pneg %p128
        $region26: #{tpu_custom_call.1} parent=11 // pred_check_branch
          %188 = sbr.rel (%p186) target = $region28
        $region27: #{tpu_custom_call.1} parent=11 // pred_region
          _
        $region28: #{tpu_custom_call.1} parent=11 // pred_fallthru
          _
      $region12: #{tpu_custom_call.1} parent=5 // pred_fallthru
        _
      %p189 = scmp.lt.s32.totalorder %s18, 8
      // Predicated region
      $region29: #{tpu_custom_call.1} parent=5 // pred_check
        %p190 = pneg %p189
      $region30: #{tpu_custom_call.1} parent=5 // pred_check_branch
        %192 = sbr.rel (%p190) target = $region32
      $region31: #{tpu_custom_call.1} parent=5 // pred_region
        // Predicated region
        $region33: #{tpu_custom_call.1} parent=31 // pred_check
          %p193 = pneg %p38
        $region34: #{tpu_custom_call.1} parent=31 // pred_check_branch
          %195 = sbr.rel (%p193) target = $region36
        $region35: #{tpu_custom_call.1} parent=31 // pred_region
          %s196 = sand.u32 %s28, 1
          %s197 = scalar_lea.sflag [#allocation3], %s196
          %s198 = sand.u32 %s28, 1
          %s199 = smul.addr %s198, 32
          %s200 = scalar_lea.vmem [#allocation2], %s199
          %s201 = smul.u32 4, %s18
          %s203 = ssub.s32 512, 512
          %204 = vsyncadd %s197, %s203
          %s205 = smul.addr %s201, 128
          %s206 = scalar_lea.hbm %s0, %s205
          %s207 = sshll.u32 %s200, 4
          %s208 = int_to_ptr.vmem [resolvable:$true] %s207
          %213 = dma.hbm_to_vmem [thread:$0]  %s206, 512, %s208, %s197, 128, 128, 8
        $region36: #{tpu_custom_call.1} parent=31 // pred_fallthru
          _
      $region32: #{tpu_custom_call.1} parent=5 // pred_fallthru
        _
      %p214 = scmp.le.s32.totalorder 1, %s18
      %p215 = scmp.lt.s32.totalorder %s18, 9
      %p216 = pnand %p214, %p215
      %p217 = pneg %p216
      // Predicated region
      $region37: #{tpu_custom_call.1} parent=5 // pred_check
        _
      $region38: #{tpu_custom_call.1} parent=5 // pred_check_branch
        %219 = sbr.rel (%p216) target = $region40
      $region39: #{tpu_custom_call.1} parent=5 // pred_region
        %s220 = ssub.s32 %s18, 1
        %s221 = sand.u32 %s31, 1
        %s222 = scalar_lea.sflag [#allocation3], %s221
        %s223 = sand.u32 %s31, 1
        %s224 = smul.addr %s223, 32
        %s225 = scalar_lea.vmem [#allocation2], %s224
        // Predicated region
        $region41: #{tpu_custom_call.1} parent=39 // pred_check
          %p226 = pneg %p44
        $region42: #{tpu_custom_call.1} parent=39 // pred_check_branch
          %228 = sbr.rel (%p226) target = $region44
        $region43: #{tpu_custom_call.1} parent=39 // pred_region
          %229 = dma.done %s222, 512
        $region44: #{tpu_custom_call.1} parent=39 // pred_fallthru
          _
        // Predicated region
        $region45: #{tpu_custom_call.1} parent=39 // pred_check
          %p230 = pneg %p65
        $region46: #{tpu_custom_call.1} parent=39 // pred_check_branch
          %232 = sbr.rel (%p230) target = $region48
        $region47: #{tpu_custom_call.1} parent=39 // pred_region
          %233 = dma.done [#allocation6], 128
        $region48: #{tpu_custom_call.1} parent=39 // pred_fallthru
          _
        %s234 = sand.u32 %s31, 1
        %s235 = scalar_lea.sflag [#allocation3], %s234
        %s236 = sand.u32 %s31, 1
        %s237 = smul.addr %s236, 32
        %s238 = scalar_lea.vmem [#allocation2], %s237
        %p239 = pneg %p44
        %p240 = pneg %p41
        %p241 = pneg %p65
        %p242 = pneg %p62
        %p243 = pneg %p86
        %p244 = pneg %p83
        %p245 = pneg %p107
        %p246 = pneg %p104
        %p247 = pneg %p128
        %p248 = pneg %p125
        %p249 = pneg %p154
        %p250 = pneg %p151
        %s251 = sand.u32 %s141, 1
        %s252 = scalar_lea.sflag [#allocation4], %s251
        %s253 = sand.u32 %s141, 1
        %s254 = smul.addr %s253, 32
        %s255 = scalar_lea.vmem [#allocation7], %s254
        %s256 = smul.u32 4, %s23
        %s257 = smul.u32 4, %s23
        %v258 = vld [vmem:[%s225] sm:$0xff]
        %v259 = vld [vmem:[%s225 + $0x8] sm:$0xff]
        %v260 = vld [vmem:[%s225 + $0x10] sm:$0xff]
        %v261 = vld [vmem:[%s225 + $0x18] sm:$0xff]
        %262 = vadd.xlane.f32.xlu0 %v258
        %v263 = vpop.xlane.xlu0 %262
        %264 = vadd.xlane.f32.xlu0 %v259
        %v265 = vpop.xlane.xlu0 %264
        %266 = vadd.xlane.f32.xlu0 %v260
        %v267 = vpop.xlane.xlu0 %266
        %268 = vadd.xlane.f32.xlu0 %v261
        %v269 = vpop.xlane.xlu0 %268
        %v270 = vrcp.pop 128.0
        %v271 = vmul.f32 %v263, %v270
        %v272 = vmul.f32 %v265, %v270
        %v273 = vmul.f32 %v267, %v270
        %v274 = vmul.f32 %v269, %v270
        %v275 = vld [vmem:[#allocation5] sm:$0xff]
        %v276 = vld [vmem:[%s2] sm:$0x1]
        %v278 = vlaneseq
        %v279 = vshrl.u32 %v278, 7
        %v280 = vsub.s32 0, %v279
        %v281 = vrot.slane %v276, %v280
        %v287 = vlaneseq
        %v288 = vand.u32 %v287, 127
        %v289 = vlaneseq
        %v290 = vshrl.u32 %v289, 7
        %v291 = vsub.s32 %v288, %v290
        %v292 = vrot.slane %v271, %v291
        %v293 = vlaneseq
        %v294 = vshrl.u32 %v293, 7
        %v295 = vsub.s32 %v288, %v294
        %v296 = vrot.slane %v272, %v295
        %v297 = vlaneseq
        %v298 = vshrl.u32 %v297, 7
        %v299 = vsub.s32 %v288, %v298
        %v300 = vrot.slane %v273, %v299
        %v301 = vlaneseq
        %v302 = vshrl.u32 %v301, 7
        %v303 = vsub.s32 %v288, %v302
        %v304 = vrot.slane %v274, %v303
        %vm305 = vcmask 1041409
        %v306 = vsel %vm305, %v296, %v292
        %vm307 = vcmask 1042434
        %v308 = vsel %vm307, %v300, %v306
        %vm309 = vcmask 1043459
        %v310 = vsel %vm309, %v304, %v308
        %vm311 = vcmask 64512
        %v312 = vsel %vm311, %v310, 0
        %314 = vmatprep.subr.mxu0 0.0
        %315 = vmatpush1.msra.mxu0 %v275
        %316 = vmatprep.subr.mxu0 0.0
        %317 = vmatpush1.msra.mxu0 0.0
        %318 = vmatprep.subr.mxu0 0.0
        %319 = vmatpush1.msra.mxu0 0.0
        %320 = vmatprep.subr.mxu0 0.0
        %321 = vmatpush1.msra.mxu0 0.0
        %322 = vmatprep.subr.mxu0 0.0
        %323 = vmatpush1.msra.mxu0 0.0
        %324 = vmatprep.subr.mxu0 0.0
        %325 = vmatpush1.msra.mxu0 0.0
        %326 = vmatprep.subr.mxu0 0.0
        %327 = vmatpush1.msra.mxu0 0.0
        %328 = vmatprep.subr.mxu0 0.0
        %329 = vmatpush1.msra.mxu0 0.0
        %330 = vmatprep.subr.mxu0 0.0
        %331 = vmatpush1.msra.mxu0 0.0
        %332 = vmatprep.subr.mxu0 0.0
        %333 = vmatpush1.msra.mxu0 0.0
        %334 = vmatprep.subr.mxu0 0.0
        %335 = vmatpush1.msra.mxu0 0.0
        %336 = vmatprep.subr.mxu0 0.0
        %337 = vmatpush1.msra.mxu0 0.0
        %338 = vmatprep.subr.mxu0 0.0
        %339 = vmatpush1.msra.mxu0 0.0
        %340 = vmatprep.subr.mxu0 0.0
        %341 = vmatpush1.msra.mxu0 0.0
        %342 = vmatprep.subr.mxu0 0.0
        %343 = vmatpush1.msra.mxu0 0.0
        %344 = vmatprep.subr.mxu0 0.0
        %345 = vmatpush1.msra.mxu0 0.0
        %346 = vmatprep.subr.mxu0 0.0
        %347 = vmatpush1.msra.mxu0 0.0
        %348 = vmatprep.subr.mxu0 0.0
        %349 = vmatpush1.msra.mxu0 0.0
        %350 = vmatprep.subr.mxu0 0.0
        %351 = vmatpush1.msra.mxu0 0.0
        %352 = vmatprep.subr.mxu0 0.0
        %353 = vmatpush1.msra.mxu0 0.0
        %354 = vmatprep.subr.mxu0 0.0
        %355 = vmatpush1.msra.mxu0 0.0
        %356 = vmatprep.subr.mxu0 0.0
        %357 = vmatpush1.msra.mxu0 0.0
        %358 = vmatprep.subr.mxu0 0.0
        %359 = vmatpush1.msra.mxu0 0.0
        %360 = vmatprep.subr.mxu0 0.0
        %361 = vmatpush1.msra.mxu0 0.0
        %362 = vmatprep.subr.mxu0 0.0
        %363 = vmatpush1.msra.mxu0 0.0
        %364 = vmatprep.subr.mxu0 0.0
        %365 = vmatpush1.msra.mxu0 0.0
        %366 = vmatprep.subr.mxu0 0.0
        %367 = vmatpush1.msra.mxu0 0.0
        %368 = vmatprep.subr.mxu0 0.0
        %369 = vmatpush1.msra.mxu0 0.0
        %370 = vmatprep.subr.mxu0 0.0
        %371 = vmatpush1.msra.mxu0 0.0
        %372 = vmatprep.subr.mxu0 0.0
        %373 = vmatpush1.msra.mxu0 0.0
        %374 = vmatprep.subr.mxu0 0.0
        %375 = vmatpush1.msra.mxu0 0.0
        %376 = vmatprep.subr.mxu0 0.0
        %377 = vmatpush1.msra.mxu0 0.0
        %378 = vmatprep.mubr.f32.mxu0 0.0
        %379 = vmatmul.mubr.f32.gmra.mrb[0].mxu0 %v312
        %v380 = vpop.f32.mrb[0].mxu0
        %v381 = vadd.f32 %v281, %v380
        %v382 = vpop.f32.mrb[0].mxu0
        %383 = vdwg.mxu0
        %v384 = vxor.u32 %v381, 2147483648
        %v385 = vmul.f32 %v384, 1.442695
        %v386 = vpow.pop %v385
        %v387 = vadd.f32 %v386, 1.0
        %v388 = vrcp.pop %v387
        %v389 = vmul.f32 1.0, %v388
        %v390 = vmul.f32 %v381, %v389
        %v391 = vld [vmem:[%s3] sm:$0xff]
        %v392 = vld [vmem:[%s4] sm:$0x1]
        %v394 = vlaneseq
        %v395 = vshrl.u32 %v394, 7
        %v396 = vsub.s32 0, %v395
        %v397 = vrot.slane %v392, %v396
        %v400 = vsel %vm311, %v390, 0
        %402 = vmatprep.subr.mxu0 0.0
        %403 = vmatpush1.msra.mxu0 %v391
        %404 = vmatprep.subr.mxu0 0.0
        %405 = vmatpush1.msra.mxu0 0.0
        %406 = vmatprep.subr.mxu0 0.0
        %407 = vmatpush1.msra.mxu0 0.0
        %408 = vmatprep.subr.mxu0 0.0
        %409 = vmatpush1.msra.mxu0 0.0
        %410 = vmatprep.subr.mxu0 0.0
        %411 = vmatpush1.msra.mxu0 0.0
        %412 = vmatprep.subr.mxu0 0.0
        %413 = vmatpush1.msra.mxu0 0.0
        %414 = vmatprep.subr.mxu0 0.0
        %415 = vmatpush1.msra.mxu0 0.0
        %416 = vmatprep.subr.mxu0 0.0
        %417 = vmatpush1.msra.mxu0 0.0
        %418 = vmatprep.subr.mxu0 0.0
        %419 = vmatpush1.msra.mxu0 0.0
        %420 = vmatprep.subr.mxu0 0.0
        %421 = vmatpush1.msra.mxu0 0.0
        %422 = vmatprep.subr.mxu0 0.0
        %423 = vmatpush1.msra.mxu0 0.0
        %424 = vmatprep.subr.mxu0 0.0
        %425 = vmatpush1.msra.mxu0 0.0
        %426 = vmatprep.subr.mxu0 0.0
        %427 = vmatpush1.msra.mxu0 0.0
        %428 = vmatprep.subr.mxu0 0.0
        %429 = vmatpush1.msra.mxu0 0.0
        %430 = vmatprep.subr.mxu0 0.0
        %431 = vmatpush1.msra.mxu0 0.0
        %432 = vmatprep.subr.mxu0 0.0
        %433 = vmatpush1.msra.mxu0 0.0
        %434 = vmatprep.subr.mxu0 0.0
        %435 = vmatpush1.msra.mxu0 0.0
        %436 = vmatprep.subr.mxu0 0.0
        %437 = vmatpush1.msra.mxu0 0.0
        %438 = vmatprep.subr.mxu0 0.0
        %439 = vmatpush1.msra.mxu0 0.0
        %440 = vmatprep.subr.mxu0 0.0
        %441 = vmatpush1.msra.mxu0 0.0
        %442 = vmatprep.subr.mxu0 0.0
        %443 = vmatpush1.msra.mxu0 0.0
        %444 = vmatprep.subr.mxu0 0.0
        %445 = vmatpush1.msra.mxu0 0.0
        %446 = vmatprep.subr.mxu0 0.0
        %447 = vmatpush1.msra.mxu0 0.0
        %448 = vmatprep.subr.mxu0 0.0
        %449 = vmatpush1.msra.mxu0 0.0
        %450 = vmatprep.subr.mxu0 0.0
        %451 = vmatpush1.msra.mxu0 0.0
        %452 = vmatprep.subr.mxu0 0.0
        %453 = vmatpush1.msra.mxu0 0.0
        %454 = vmatprep.subr.mxu0 0.0
        %455 = vmatpush1.msra.mxu0 0.0
        %456 = vmatprep.subr.mxu0 0.0
        %457 = vmatpush1.msra.mxu0 0.0
        %458 = vmatprep.subr.mxu0 0.0
        %459 = vmatpush1.msra.mxu0 0.0
        %460 = vmatprep.subr.mxu0 0.0
        %461 = vmatpush1.msra.mxu0 0.0
        %462 = vmatprep.subr.mxu0 0.0
        %463 = vmatpush1.msra.mxu0 0.0
        %464 = vmatprep.subr.mxu0 0.0
        %465 = vmatpush1.msra.mxu0 0.0
        %466 = vmatprep.mubr.f32.mxu0 0.0
        %467 = vmatmul.mubr.f32.gmra.mrb[0].mxu0 %v400
        %v468 = vpop.f32.mrb[0].mxu0
        %v469 = vadd.f32 %v397, %v468
        %v470 = vpop.f32.mrb[0].mxu0
        %471 = vdwg.mxu0
        %v472 = vxor.u32 %v469, 2147483648
        %v473 = vmul.f32 %v472, 1.442695
        %v474 = vpow.pop %v473
        %v475 = vadd.f32 %v474, 1.0
        %v476 = vrcp.pop %v475
        %v477 = vmul.f32 1.0, %v476
        %v478 = vlaneseq
        %v479 = vshrl.u32 %v478, 7
        %v480 = vsub.s32 0, %v479
        %v481 = vrot.slane %v477, %v480
        %483 = vbcast.lane.b32.xlu0 %v481, 256
        %v484 = vpop.permute.xlu0 %483
        %v485 = vlaneseq
        %v486 = vshrl.u32 %v485, 7
        %v487 = vsub.s32 1, %v486
        %v488 = vrot.slane %v477, %v487
        %490 = vbcast.lane.b32.xlu0 %v488, 256
        %v491 = vpop.permute.xlu0 %490
        %v492 = vlaneseq
        %v493 = vshrl.u32 %v492, 7
        %v494 = vsub.s32 2, %v493
        %v495 = vrot.slane %v477, %v494
        %497 = vbcast.lane.b32.xlu0 %v495, 256
        %v498 = vpop.permute.xlu0 %497
        %v499 = vlaneseq
        %v500 = vshrl.u32 %v499, 7
        %v501 = vsub.s32 3, %v500
        %v502 = vrot.slane %v477, %v501
        %504 = vbcast.lane.b32.xlu0 %v502, 256
        %v505 = vpop.permute.xlu0 %504
        %v506 = vmul.f32 %v258, %v484
        %v507 = vmul.f32 %v259, %v491
        %v508 = vmul.f32 %v260, %v498
        %v509 = vmul.f32 %v261, %v505
        %510 = vst [vmem:[%s255] sm:$0xff] %v506
        %511 = vst [vmem:[%s255 + $0x8] sm:$0xff] %v507
        %512 = vst [vmem:[%s255 + $0x10] sm:$0xff] %v508
        %513 = vst [vmem:[%s255 + $0x18] sm:$0xff] %v509
        %s514 = sand.u32 %s141, 1
        %s515 = scalar_lea.sflag [#allocation4], %s514
        %s516 = sand.u32 %s141, 1
        %s517 = smul.addr %s516, 32
        %s518 = scalar_lea.vmem [#allocation7], %s517
        // Predicated region
        $region49: #{tpu_custom_call.1} parent=39 // pred_check
          %p519 = pneg %p151
        $region50: #{tpu_custom_call.1} parent=39 // pred_check_branch
          %521 = sbr.rel (%p519) target = $region52
        $region51: #{tpu_custom_call.1} parent=39 // pred_region
          %s522 = smul.u32 4, %s23
          %s524 = ssub.s32 512, 512
          %525 = vsyncadd %s515, %s524
          %s526 = smul.addr %s522, 128
          %s527 = scalar_lea.hbm %s5, %s526
          %s528 = sshll.u32 %s518, 4
          %s529 = int_to_ptr.vmem [resolvable:$true] %s528
          %534 = dma.vmem_to_hbm [thread:$0]  %s529, 512, %s527, %s515, 128, 128, 8
        $region52: #{tpu_custom_call.1} parent=39 // pred_fallthru
          _
      $region40: #{tpu_custom_call.1} parent=5 // pred_fallthru
        _
      %p535 = scmp.le.s32.totalorder 2, %s18
      // Predicated region
      $region53: #{tpu_custom_call.1} parent=5 // pred_check
        %p536 = pneg %p535
      $region54: #{tpu_custom_call.1} parent=5 // pred_check_branch
        %538 = sbr.rel (%p536) target = $region56
      $region55: #{tpu_custom_call.1} parent=5 // pred_region
        %s539 = ssub.s32 %s18, 2
        // Predicated region
        $region57: #{tpu_custom_call.1} parent=55 // pred_check
          %p540 = pneg %p157
        $region58: #{tpu_custom_call.1} parent=55 // pred_check_branch
          %542 = sbr.rel (%p540) target = $region60
        $region59: #{tpu_custom_call.1} parent=55 // pred_region
          %s543 = sand.u32 %s142, 1
          %s544 = scalar_lea.sflag [#allocation4], %s543
          %s545 = sand.u32 %s142, 1
          %s546 = smul.addr %s545, 32
          %s547 = scalar_lea.vmem [#allocation7], %s546
          %548 = dma.done %s544, 512
        $region60: #{tpu_custom_call.1} parent=55 // pred_fallthru
          _
      $region56: #{tpu_custom_call.1} parent=5 // pred_fallthru
        _
    $region6: #{tpu_custom_call.1} parent=1 // loop_footer
      %s22 = sadd.s32 1, %s18
    $region7: #{tpu_custom_call.1} parent=1 // loop_footer_branch
      %17 = sbr.rel target = $region3
    $region8: #{tpu_custom_call.1} parent=1 // loop_exit
      _
    %549 = vsyncpa [#allocation3], 1
    %s550 = scalar_lea.sflag [#allocation3], 1
    %551 = vsyncpa %s550, 1
    %552 = vsyncpa [#allocation6], 1
    %553 = vsyncpa [#allocation4], 1
    %s554 = scalar_lea.sflag [#allocation4], 1
    %555 = vsyncpa %s554, 1

</llo_original>
